<compile_context>
chip_gen: v5e
topology: v5e:2x2
jax: 0.10.0
libtpu: 0.0.40
codegen_flags: <defaults>
</compile_context>

<pallas_src>
import functools

import jax
import jax.numpy as jnp
from jax import lax
from jax.experimental import pallas as pl
from jax.experimental.pallas import tpu as pltpu

LANES = 128
SUBLANES = 8


def _device_defaults():
    """Pick tile size / core-split policy from the local device kind."""
    try:
        kind = jax.devices()[0].device_kind.lower()
    except Exception:  # pragma: no cover - be safe on exotic backends
        kind = ""
    multi_tc = "v7" in kind          # v7x: 2 TensorCores per chip
    max_tile_rows = 4096 if multi_tc else 2048
    max_splits = 2 if multi_tc else 1
    return max_tile_rows, max_splits


def _bce_blur_kernel(pred_ref, true_ref, out_ref, acc_ref, *,
                     alpha_scale, n_valid, tiles_per_split):
    c = pl.program_id(0)          # core-split axis ("parallel")
    j = pl.program_id(1)          # reduction axis ("arbitrary")

    @pl.when(j == 0)
    def _():
        acc_ref[...] = jnp.zeros_like(acc_ref)

    x = pred_ref[...].astype(jnp.float32)
    y = true_ref[...].astype(jnp.float32)

    # Shared transcendental: e = exp(-|x|)
    e = jnp.exp(-jnp.abs(x))
    # BCEWithLogitsLoss(reduction='none'), numerically stable:
    #   max(x, 0) - x*y + log(1 + exp(-|x|))
    bce = jnp.maximum(x, 0.0) - x * y + jnp.log1p(e)
    # sigmoid(x) rebuilt from the same e:  x>=0 -> 1/(1+e), x<0 -> e/(1+e).
    # Approx reciprocal (EUP) + one Newton step -> ~f32 accuracy, no divide.
    d = 1.0 + e
    r = pl.reciprocal(d, approx=True)
    r = r * (2.0 - d * r)
    p = jnp.where(x >= 0.0, 1.0, e) * r

    dx = p - y
    alpha_factor = 1.0 - jnp.exp((dx - 1.0) * alpha_scale)
    loss = bce * alpha_factor

    block_rows, block_cols = loss.shape
    tile_elems = block_rows * block_cols
    base = (c * tiles_per_split + j) * tile_elems        # scalar, int32
    is_full_tile = base + tile_elems <= n_valid

    # Fast path: tile is entirely valid -> unmasked vreg-wise accumulate.
    @pl.when(is_full_tile)
    def _():
        acc_ref[...] += loss.reshape(-1, SUBLANES, block_cols).sum(axis=0)

    # Slow path (at most one tile): mask out pad / out-of-range elements by
    # flat-index compare (jnp.where is a select, so OOB garbage can't poison
    # the sum even if it is NaN/Inf).
    @pl.when(jnp.logical_not(is_full_tile))
    def _():
        row_ids = lax.broadcasted_iota(jnp.int32, loss.shape, 0)
        col_ids = lax.broadcasted_iota(jnp.int32, loss.shape, 1)
        flat_idx = base + row_ids * block_cols + col_ids
        masked = jnp.where(flat_idx < n_valid, loss, 0.0)
        acc_ref[...] += masked.reshape(-1, SUBLANES, block_cols).sum(axis=0)

    @pl.when(j == pl.num_programs(1) - 1)
    def _():
        out_ref[...] = jnp.broadcast_to(jnp.sum(acc_ref[...]), out_ref.shape)


def bce_blur_with_logits_loss(pred, true, alpha=0.05):
    """Pallas equivalent of BCEBlurWithLogitsLoss.forward. Returns scalar f32."""
    assert pred.shape == true.shape
    n = pred.size
    assert n < 2**31, "int32 flat-index masking limits numel to < 2^31"

    max_tile_rows, max_splits = _device_defaults()

    pred_flat = pred.reshape(-1)
    true_flat = true.reshape(-1)

    # Pad the flat length to a multiple of 8*128 so every tile is a whole
    # number of (8,128) vregs (required by the (-1,8,128) accumulator
    # reshape). Worst case 1023 extra elements; common NCHW sizes need none.
    pad = (-n) % (SUBLANES * LANES)
    if pad:
        pred_flat = jnp.pad(pred_flat, (0, pad))
        true_flat = jnp.pad(true_flat, (0, pad))
    rows = (n + pad) // LANES
    pred2d = pred_flat.reshape(rows, LANES)
    true2d = true_flat.reshape(rows, LANES)

    # Tile sizing: one full-array tile when small, else big aligned tiles.
    tile_rows = rows if rows <= max_tile_rows else max_tile_rows
    num_tiles = (rows + tile_rows - 1) // tile_rows

    # Core split only when it never creates a phantom (re-DMA'd) tile.
    num_splits = max_splits if (max_splits > 1 and num_tiles % max_splits == 0) else 1
    tiles_per_split = num_tiles // num_splits

    kernel = functools.partial(
        _bce_blur_kernel,
        alpha_scale=1.0 / (float(alpha) + 1e-4),
        n_valid=n,
        tiles_per_split=tiles_per_split,
    )

    def in_map(c, j):
        return (c * tiles_per_split + j, 0)

    tile_spec = pl.BlockSpec((tile_rows, LANES), in_map)

    partials = pl.pallas_call(
        kernel,
        out_shape=jax.ShapeDtypeStruct((num_splits, 1, 1), jnp.float32),
        grid_spec=pltpu.PrefetchScalarGridSpec(
            num_scalar_prefetch=0,
            grid=(num_splits, tiles_per_split),
            in_specs=[tile_spec, tile_spec],
            out_specs=pl.BlockSpec((1, 1, 1), lambda c, j: (c, 0, 0)),
            scratch_shapes=[pltpu.VMEM((SUBLANES, LANES), jnp.float32)],
        ),
        # TODO(synk): on v7x verify in xprof that the leading axis actually
        # shards across both TensorCores; if not, switch to pltpu.CORE_PARALLEL.
        compiler_params=pltpu.CompilerParams(
            dimension_semantics=("parallel", "arbitrary")),
    )(pred2d, true2d)

    return jnp.sum(partials) * (1.0 / float(n))


def _reference(pred, true, alpha=0.05):
    x = pred.astype(jnp.float32)
    y = true.astype(jnp.float32)
    bce = jnp.maximum(x, 0.0) - x * y + jnp.log1p(jnp.exp(-jnp.abs(x)))
    p = jax.nn.sigmoid(x)
    dx = p - y
    alpha_factor = 1.0 - jnp.exp((dx - 1.0) / (alpha + 1e-4))
    return jnp.mean(bce * alpha_factor)


if __name__ == "__main__":
    key = jax.random.PRNGKey(0)
    k1, k2 = jax.random.split(key)
    shape = (2, 4, 16, 16)   # NCHW: batch=2, channels=4, 16x16
    pred = jax.random.normal(k1, shape, dtype=jnp.float32)
    true = (jax.random.uniform(k2, shape) > 0.5).astype(jnp.float32)

    out = bce_blur_with_logits_loss(pred, true, alpha=0.05)
    out = jax.block_until_ready(out)

    ref = _reference(pred, true, alpha=0.05)
    assert jnp.allclose(out, ref, atol=1e-5, rtol=1e-5), (out, ref)
    print("KERNEL_OK")
</pallas_src>

<mosaic_0001>
module attributes {stable_mosaic.version = 11 : i64} {
  func.func @_bce_blur_kernel(%arg0: i32, %arg1: i32, %arg2: memref<16x128xf32, #tpu.memory_space<vmem>>, %arg3: memref<16x128xf32, #tpu.memory_space<vmem>>, %arg4: memref<1x1x1xf32, #tpu.memory_space<vmem>>, %arg5: memref<8x128xf32, #tpu.memory_space<vmem>>) attributes {dimension_semantics = [#tpu.dimension_semantics<parallel>, #tpu.dimension_semantics<arbitrary>], iteration_bounds = array<i64: 1, 1>, scalar_prefetch = 0 : i64, scratch_operands = 1 : i64, tpu.core_type = #tpu.core_type<tc>, window_params = [{transform_indices = @transform_0, window_bounds = array<i64: 16, 128>}, {transform_indices = @transform_1, window_bounds = array<i64: 16, 128>}, {transform_indices = @transform_2, window_bounds = array<i64: 1, 1, 1>}]} {
    %c0_i32 = arith.constant 0 : i32
    %0 = arith.cmpi eq, %arg1, %c0_i32 : i32
    %1 = arith.extui %0 : i1 to i32
    %c0_i32_0 = arith.constant 0 : i32
    %2 = arith.cmpi ne, %1, %c0_i32_0 : i32
    scf.if %2 {
      %cst_18 = arith.constant 0.000000e+00 : f32
      %49 = vector.broadcast %cst_18 : f32 to vector<8x128xf32>
      %c0_19 = arith.constant 0 : index
      %c0_20 = arith.constant 0 : index
      %50 = vector.load %arg5[%c0_19, %c0_20] : memref<8x128xf32, #tpu.memory_space<vmem>>, vector<8x128xf32>
      tpu.vector_store %arg5[%c0_19, %c0_20], %49 {strides = array<i32>} : memref<8x128xf32, #tpu.memory_space<vmem>>, vector<8x128xf32>,
    } else {
    }
    %c0 = arith.constant 0 : index
    %c0_1 = arith.constant 0 : index
    %3 = vector.load %arg2[%c0, %c0_1] : memref<16x128xf32, #tpu.memory_space<vmem>>, vector<16x128xf32>
    %c0_2 = arith.constant 0 : index
    %c0_3 = arith.constant 0 : index
    %4 = vector.load %arg3[%c0_2, %c0_3] : memref<16x128xf32, #tpu.memory_space<vmem>>, vector<16x128xf32>
    %5 = math.absf %3 : vector<16x128xf32>
    %cst = arith.constant 0.000000e+00 : f32
    %6 = vector.broadcast %cst : f32 to vector<16x128xf32>
    %7 = arith.subf %6, %5 : vector<16x128xf32>
    %8 = math.exp %7 : vector<16x128xf32>
    %cst_4 = arith.constant 0.000000e+00 : f32
    %9 = vector.broadcast %cst_4 : f32 to vector<16x128xf32>
    %10 = arith.maximumf %3, %9 : vector<16x128xf32>
    %11 = arith.mulf %3, %4 : vector<16x128xf32>
    %12 = arith.subf %10, %11 : vector<16x128xf32>
    %13 = math.log1p %8 : vector<16x128xf32>
    %14 = arith.addf %12, %13 : vector<16x128xf32>
    %cst_5 = arith.constant 1.000000e+00 : f32
    %15 = vector.broadcast %cst_5 : f32 to vector<16x128xf32>
    %16 = arith.addf %15, %8 : vector<16x128xf32>
    %17 = tpu.reciprocal %16 {approx = true} : vector<16x128xf32> -> vector<16x128xf32>
    %18 = arith.mulf %16, %17 : vector<16x128xf32>
    %cst_6 = arith.constant 2.000000e+00 : f32
    %19 = vector.broadcast %cst_6 : f32 to vector<16x128xf32>
    %20 = arith.subf %19, %18 : vector<16x128xf32>
    %21 = arith.mulf %17, %20 : vector<16x128xf32>
    %cst_7 = arith.constant 0.000000e+00 : f32
    %22 = vector.broadcast %cst_7 : f32 to vector<16x128xf32>
    %23 = arith.cmpf oge, %3, %22 : vector<16x128xf32>
    %cst_8 = arith.constant 1.000000e+00 : f32
    %24 = vector.broadcast %cst_8 : f32 to vector<16x128xf32>
    %25 = arith.select %23, %24, %8 : vector<16x128xi1>, vector<16x128xf32>
    %26 = arith.mulf %25, %21 : vector<16x128xf32>
    %27 = arith.subf %26, %4 : vector<16x128xf32>
    %cst_9 = arith.constant 1.000000e+00 : f32
    %28 = vector.broadcast %cst_9 : f32 to vector<16x128xf32>
    %29 = arith.subf %27, %28 : vector<16x128xf32>
    %cst_10 = arith.constant 19.9600792 : f32
    %30 = vector.broadcast %cst_10 : f32 to vector<16x128xf32>
    %31 = arith.mulf %29, %30 : vector<16x128xf32>
    %32 = math.exp %31 : vector<16x128xf32>
    %cst_11 = arith.constant 1.000000e+00 : f32
    %33 = vector.broadcast %cst_11 : f32 to vector<16x128xf32>
    %34 = arith.subf %33, %32 : vector<16x128xf32>
    %35 = arith.mulf %14, %34 : vector<16x128xf32>
    %c1_i32 = arith.constant 1 : i32
    %36 = arith.muli %arg0, %c1_i32 : i32
    %37 = arith.addi %36, %arg1 : i32
    %c2048_i32 = arith.constant 2048 : i32
    %38 = arith.muli %37, %c2048_i32 : i32
    %c2048_i32_12 = arith.constant 2048 : i32
    %39 = arith.addi %38, %c2048_i32_12 : i32
    %c2048_i32_13 = arith.constant 2048 : i32
    %40 = arith.cmpi sle, %39, %c2048_i32_13 : i32
    %41 = arith.extui %40 : i1 to i32
    %c0_i32_14 = arith.constant 0 : i32
    %42 = arith.cmpi ne, %41, %c0_i32_14 : i32
    scf.if %42 {
      %c0_18 = arith.constant 0 : index
      %c0_19 = arith.constant 0 : index
      %49 = vector.load %arg5[%c0_18, %c0_19] : memref<8x128xf32, #tpu.memory_space<vmem>>, vector<8x128xf32>
      %50 = vector.shape_cast %35 : vector<16x128xf32> to vector<2x8x128xf32>
      %cst_20 = arith.constant dense<0.000000e+00> : vector<8x128xf32>
      %51 = vector.multi_reduction <add>, %50, %cst_20 [0] : vector<2x8x128xf32> to vector<8x128xf32>
      %52 = arith.addf %49, %51 : vector<8x128xf32>
      %c0_21 = arith.constant 0 : index
      %c0_22 = arith.constant 0 : index
      %53 = vector.load %arg5[%c0_21, %c0_22] : memref<8x128xf32, #tpu.memory_space<vmem>>, vector<8x128xf32>
      tpu.vector_store %arg5[%c0_21, %c0_22], %52 {strides = array<i32>} : memref<8x128xf32, #tpu.memory_space<vmem>>, vector<8x128xf32>,
    } else {
    }
    %true = arith.constant true
    %43 = arith.xori %40, %true : i1
    %44 = arith.extui %43 : i1 to i32
    %c0_i32_15 = arith.constant 0 : i32
    %45 = arith.cmpi ne, %44, %c0_i32_15 : i32
    scf.if %45 {
      %49 = tpu.iota {dimensions = array<i32: 0>} : vector<16x128xi32>
      %50 = tpu.iota {dimensions = array<i32: 1>} : vector<16x128xi32>
      %c128_i32 = arith.constant 128 : i32
      %51 = vector.broadcast %c128_i32 : i32 to vector<16x128xi32>
      %52 = arith.muli %49, %51 : vector<16x128xi32>
      %53 = vector.broadcast %38 : i32 to vector<16x128xi32>
      %54 = arith.addi %53, %52 : vector<16x128xi32>
      %55 = arith.addi %54, %50 : vector<16x128xi32>
      %c2048_i32_18 = arith.constant 2048 : i32
      %56 = vector.broadcast %c2048_i32_18 : i32 to vector<16x128xi32>
      %57 = arith.cmpi slt, %55, %56 : vector<16x128xi32>
      %cst_19 = arith.constant 0.000000e+00 : f32
      %58 = vector.broadcast %cst_19 : f32 to vector<16x128xf32>
      %59 = arith.select %57, %35, %58 : vector<16x128xi1>, vector<16x128xf32>
      %c0_20 = arith.constant 0 : index
      %c0_21 = arith.constant 0 : index
      %60 = vector.load %arg5[%c0_20, %c0_21] : memref<8x128xf32, #tpu.memory_space<vmem>>, vector<8x128xf32>
      %61 = vector.shape_cast %59 : vector<16x128xf32> to vector<2x8x128xf32>
      %cst_22 = arith.constant dense<0.000000e+00> : vector<8x128xf32>
      %62 = vector.multi_reduction <add>, %61, %cst_22 [0] : vector<2x8x128xf32> to vector<8x128xf32>
      %63 = arith.addf %60, %62 : vector<8x128xf32>
      %c0_23 = arith.constant 0 : index
      %c0_24 = arith.constant 0 : index
      %64 = vector.load %arg5[%c0_23, %c0_24] : memref<8x128xf32, #tpu.memory_space<vmem>>, vector<8x128xf32>
      tpu.vector_store %arg5[%c0_23, %c0_24], %63 {strides = array<i32>} : memref<8x128xf32, #tpu.memory_space<vmem>>, vector<8x128xf32>,
    } else {
    }
    %c0_i32_16 = arith.constant 0 : i32
    %46 = arith.cmpi eq, %arg1, %c0_i32_16 : i32
    %47 = arith.extui %46 : i1 to i32
    %c0_i32_17 = arith.constant 0 : i32
    %48 = arith.cmpi ne, %47, %c0_i32_17 : i32
    scf.if %48 {
      %c0_18 = arith.constant 0 : index
      %c0_19 = arith.constant 0 : index
      %49 = vector.load %arg5[%c0_18, %c0_19] : memref<8x128xf32, #tpu.memory_space<vmem>>, vector<8x128xf32>
      %50 = vector.shape_cast %49 : vector<8x128xf32> to vector<1x8x128xf32>
      %cst_20 = arith.constant dense<0.000000e+00> : vector<1xf32>
      %51 = vector.multi_reduction <add>, %50, %cst_20 [1, 2] : vector<1x8x128xf32> to vector<1xf32>
      %52 = vector.shape_cast %51 : vector<1xf32> to vector<1x1x1xf32>
      %53 = vector.extract %52[0, 0, 0] : f32 from vector<1x1x1xf32>
      %54 = vector.broadcast %53 : f32 to vector<1x1x1xf32>
      %c0_21 = arith.constant 0 : index
      %c0_22 = arith.constant 0 : index
      %c0_23 = arith.constant 0 : index
      %55 = vector.load %arg4[%c0_21, %c0_22, %c0_23] : memref<1x1x1xf32, #tpu.memory_space<vmem>>, vector<1x1x1xf32>
      tpu.vector_store %arg4[%c0_21, %c0_22, %c0_23], %54 {strides = array<i32>} : memref<1x1x1xf32, #tpu.memory_space<vmem>>, vector<1x1x1xf32>,
    } else {
    }
    return
  }
  func.func @transform_0(%arg0: i32, %arg1: i32) -> (i32, i32) {
    %c1_i32 = arith.constant 1 : i32
    %0 = arith.muli %arg0, %c1_i32 : i32
    %1 = arith.addi %0, %arg1 : i32
    %c0_i32 = arith.constant 0 : i32
    %c0_i32_0 = arith.constant 0 : i32
    return %1, %c0_i32 : i32, i32
  }
  func.func @transform_1(%arg0: i32, %arg1: i32) -> (i32, i32) {
    %c1_i32 = arith.constant 1 : i32
    %0 = arith.muli %arg0, %c1_i32 : i32
    %1 = arith.addi %0, %arg1 : i32
    %c0_i32 = arith.constant 0 : i32
    %c0_i32_0 = arith.constant 0 : i32
    return %1, %c0_i32 : i32, i32
  }
  func.func @transform_2(%arg0: i32, %arg1: i32) -> (i32, i32, i32) {
    %c0_i32 = arith.constant 0 : i32
    %c0_i32_0 = arith.constant 0 : i32
    %c0_i32_1 = arith.constant 0 : i32
    return %arg0, %c0_i32, %c0_i32_0 : i32, i32, i32
  }
}

</mosaic_0001>

<llo_original>
// kernel: tpu_custom_call.1
$region0: #{tpu_custom_call.1}
  #allocation0 [shape = 'u32[]', space=smem, size = 0x4, offset = 0x4, fixed_abs, tag = 'smem constant byte address 0x4 - core index']
  #allocation1 [shape = 'u32[72,128]{1,0:T(1,128)}', space=vmem, size = 0x9000, scoped, tag = 'internal scratch']
  #allocation2 [shape = 'f32[8,128]{1,0:T(8,128)}', space=vmem, size = 0x1000, scoped, tag = 'scratch operand']
  %s0 = inlined_call_operand.hbm [shape: f32[16,128], index: 0, kind: input, shape index: {}]
  %s1 = inlined_call_operand.hbm [shape: f32[16,128], index: 1, kind: input, shape index: {}]
  %s2 = inlined_call_operand.hbm [shape: f32[1,1,1], index: 2, kind: output, shape index: {}]
  %s3 = sld [smem:[#allocation0]]
  $region42: #{tpu_custom_call.1} parent=0
    _
  %s5 = ssub.s32 1, %s3
  %s6 = scalar_select 0, %s5, %s3
  $region1: #{tpu_custom_call.1} parent=0
    #allocation3 [shape = 'u8[8192]{0}', space=vmem, size = 0x2000, scoped, tag = 'input window, operand 0, single buffered']
    #allocation4 [shape = 's32[1]{0}', space=sflag, size = 0x4, scoped, tag = 'scoped memory for tpu_custom_call.1']
    #allocation5 [shape = 's32[1]{0}', space=sflag, size = 0x4, scoped, tag = 'scoped memory for tpu_custom_call.1']
    #allocation6 [shape = 'u8[8192]{0}', space=vmem, size = 0x2000, scoped, tag = 'input window, operand 1, single buffered']
    #allocation7 [shape = 's32[1]{0}', space=sflag, size = 0x4, scoped, tag = 'scoped memory for tpu_custom_call.1']
    #allocation8 [shape = 'u8[512]{0}', space=vmem, size = 0x400, scoped, tag = 'output window, operand 0, single buffered']
    %7 = vsyncpa [#allocation4], 0
    %8 = vsyncpa [#allocation7], 0
    %9 = vsyncpa [#allocation5], 0
    // Predicated region
    $region2: #{tpu_custom_call.1} parent=1 // pred_check
      _
    $region3: #{tpu_custom_call.1} parent=1 // pred_check_branch
      %11 = sbr.rel (0) target = $region5
    $region4: #{tpu_custom_call.1} parent=1 // pred_region
      %s12 = sadd.s32 0, 0
      %s13 = smul.u32 2, %s12
      %15 = vsyncadd [#allocation4], 0
      %s16 = smul.addr %s13, 8
      %s17 = scalar_lea.hbm %s0, %s16
      %s18 = sshll.u32 %s17, 4
      %s19 = int_to_ptr.hbm [resolvable:$true] %s18
      %s20 = sshll.u32 [#allocation3], 4
      %s21 = int_to_ptr.vmem [resolvable:$true] %s20
      %26 = dma.hbm_to_vmem [thread:$0]  %s19, 256, %s21, [#allocation4], 128, 128, 8
    $region5: #{tpu_custom_call.1} parent=1 // pred_fallthru
      _
    // Predicated region
    $region6: #{tpu_custom_call.1} parent=1 // pred_check
      _
    $region7: #{tpu_custom_call.1} parent=1 // pred_check_branch
      %28 = sbr.rel (0) target = $region9
    $region8: #{tpu_custom_call.1} parent=1 // pred_region
      %s29 = sadd.s32 0, 0
      %s30 = smul.u32 2, %s29
      %32 = vsyncadd [#allocation7], 0
      %s33 = smul.addr %s30, 8
      %s34 = scalar_lea.hbm %s1, %s33
      %s35 = sshll.u32 %s34, 4
      %s36 = int_to_ptr.hbm [resolvable:$true] %s35
      %s37 = sshll.u32 [#allocation6], 4
      %s38 = int_to_ptr.vmem [resolvable:$true] %s37
      %43 = dma.hbm_to_vmem [thread:$0]  %s36, 256, %s38, [#allocation7], 128, 128, 8
    $region9: #{tpu_custom_call.1} parent=1 // pred_fallthru
      _
    // Predicated region
    $region10: #{tpu_custom_call.1} parent=1 // pred_check
      _
    $region11: #{tpu_custom_call.1} parent=1 // pred_check_branch
      %45 = sbr.rel (0) target = $region13
    $region12: #{tpu_custom_call.1} parent=1 // pred_region
      %47 = dma.done [#allocation4], 256
    $region13: #{tpu_custom_call.1} parent=1 // pred_fallthru
      _
    // Predicated region
    $region14: #{tpu_custom_call.1} parent=1 // pred_check
      _
    $region15: #{tpu_custom_call.1} parent=1 // pred_check_branch
      %49 = sbr.rel (0) target = $region17
    $region16: #{tpu_custom_call.1} parent=1 // pred_region
      %51 = dma.done [#allocation7], 256
    $region17: #{tpu_custom_call.1} parent=1 // pred_fallthru
      _
    %s52 = sadd.s32 0, 0
    %s53 = smul.u32 2, %s52
    %s54 = sadd.s32 0, 0
    %s55 = smul.u32 2, %s54
    %p56 = scmp.eq.s32.totalorder 0, 0
    // Predicated region
    $region18: #{tpu_custom_call.1} parent=1 // pred_check
      %p57 = pneg %p56
    $region19: #{tpu_custom_call.1} parent=1 // pred_check_branch
      %59 = sbr.rel (%p57) target = $region21
    $region20: #{tpu_custom_call.1} parent=1 // pred_region
      %60 = vst [vmem:[#allocation2] sm:$0xff] 0.0
    $region21: #{tpu_custom_call.1} parent=1 // pred_fallthru
      _
    %v61 = vld [vmem:[#allocation3] sm:$0xff]
    %v62 = vld [vmem:[#allocation3 + $0x8] sm:$0xff]
    %v63 = vld [vmem:[#allocation6] sm:$0xff]
    %v64 = vld [vmem:[#allocation6 + $0x8] sm:$0xff]
    %v65 = vand.u32 2147483647, %v61
    %v66 = vand.u32 2147483647, %v62
    %v67 = vsub.f32 0.0, %v65
    %v68 = vsub.f32 0.0, %v66
    %v69 = vmul.f32 %v67, 1.442695
    %v70 = vpow.pop %v69
    %v71 = vmul.f32 %v68, 1.442695
    %v72 = vpow.pop %v71
    %v73 = vmax.f32 %v61, 0.0
    %v74 = vmax.f32 %v62, 0.0
    %v75 = vmul.f32 %v61, %v63
    %v76 = vmul.f32 %v62, %v64
    %v77 = vsub.f32 %v73, %v75
    %v78 = vsub.f32 %v74, %v76
    %v79 = vadd.f32 %v70, 1.0
    %v80 = vlog2.pop %v79
    %v81 = vmul.f32 %v80, 0.6931472
    %v82 = vmul.f32 -0.5, %v70
    %v83 = vadd.f32 %v82, 1.0
    %v84 = vmul.f32 %v83, %v70
    %v85 = vand.u32 2147483647, %v70
    %vm86 = vcmp.lt.f32.partialorder %v85, 0.0004427343
    %v87 = vsel %vm86, %v84, %v81
    %v88 = vadd.f32 %v72, 1.0
    %v89 = vlog2.pop %v88
    %v90 = vmul.f32 %v89, 0.6931472
    %v91 = vmul.f32 -0.5, %v72
    %v92 = vadd.f32 %v91, 1.0
    %v93 = vmul.f32 %v92, %v72
    %v94 = vand.u32 2147483647, %v72
    %vm95 = vcmp.lt.f32.partialorder %v94, 0.0004427343
    %v96 = vsel %vm95, %v93, %v90
    %v97 = vadd.f32 %v77, %v87
    %v98 = vadd.f32 %v78, %v96
    %v99 = vadd.f32 %v70, 1.0
    %v100 = vadd.f32 %v72, 1.0
    %v101 = vrcp.pop %v99
    %v102 = vrcp.pop %v100
    %v103 = vmul.f32 %v99, %v101
    %v104 = vmul.f32 %v100, %v102
    %v105 = vsub.f32 2.0, %v103
    %v106 = vsub.f32 2.0, %v104
    %v107 = vmul.f32 %v101, %v105
    %v108 = vmul.f32 %v102, %v106
    %vm109 = vcmp.ge.f32.partialorder %v61, 0.0
    %vm110 = vcmp.ge.f32.partialorder %v62, 0.0
    %v111 = vsel %vm109, 1.0, %v70
    %v112 = vsel %vm110, 1.0, %v72
    %v113 = vmul.f32 %v111, %v107
    %v114 = vmul.f32 %v112, %v108
    %v115 = vsub.f32 %v113, %v63
    %v116 = vsub.f32 %v114, %v64
    %v117 = vsub.f32 %v115, 1.0
    %v118 = vsub.f32 %v116, 1.0
    %v119 = vmul.f32 %v117, 19.96008
    %v120 = vmul.f32 %v118, 19.96008
    %v121 = vmul.f32 %v119, 1.442695
    %v122 = vpow.pop %v121
    %v123 = vmul.f32 %v120, 1.442695
    %v124 = vpow.pop %v123
    %v125 = vsub.f32 1.0, %v122
    %v126 = vsub.f32 1.0, %v124
    %v127 = vmul.f32 %v97, %v125
    %v128 = vmul.f32 %v98, %v126
    %s129 = sadd.s32 0, 0
    %s130 = smul.u32 %s129, 2048
    %s131 = sadd.s32 %s130, 2048
    %p132 = scmp.le.s32.totalorder %s131, 2048
    // Predicated region
    $region22: #{tpu_custom_call.1} parent=1 // pred_check
      %p133 = pneg %p132
    $region23: #{tpu_custom_call.1} parent=1 // pred_check_branch
      %135 = sbr.rel (%p133) target = $region25
    $region24: #{tpu_custom_call.1} parent=1 // pred_region
      %v136 = vld [vmem:[#allocation2] sm:$0xff]
      %v137 = vadd.f32 %v127, %v128
      %v138 = vadd.f32 %v136, %v137
      %139 = vst [vmem:[#allocation2] sm:$0xff] %v138
    $region25: #{tpu_custom_call.1} parent=1 // pred_fallthru
      _
    %p140 = scmp.gt.s32.totalorder %s131, 2048
    // Predicated region
    $region26: #{tpu_custom_call.1} parent=1 // pred_check
      %p141 = pneg %p140
    $region27: #{tpu_custom_call.1} parent=1 // pred_check_branch
      %143 = sbr.rel (%p141) target = $region29
    $region28: #{tpu_custom_call.1} parent=1 // pred_region
      %v144 = vlaneseq
      %v145 = vshrl.u32 %v144, 7
      %v146 = vadd.s32 %v145, 8
      %v147 = vlaneseq
      %v148 = vand.u32 %v147, 127
      %v149 = vmul.u32 %v145, 128
      %v150 = vmul.u32 %v146, 128
      %v151 = vstv %s130
      %v152 = vadd.s32 %v151, %v149
      %v153 = vadd.s32 %v151, %v150
      %v154 = vadd.s32 %v152, %v148
      %v155 = vadd.s32 %v153, %v148
      %vm156 = vcmp.lt.s32.totalorder %v154, 2048
      %vm157 = vcmp.lt.s32.totalorder %v155, 2048
      %v158 = vsel %vm156, %v127, 0.0
      %v159 = vsel %vm157, %v128, 0.0
      %v160 = vld [vmem:[#allocation2] sm:$0xff]
      %v161 = vadd.f32 %v158, %v159
      %v162 = vadd.f32 %v160, %v161
      %163 = vst [vmem:[#allocation2] sm:$0xff] %v162
    $region29: #{tpu_custom_call.1} parent=1 // pred_fallthru
      _
    // Predicated region
    $region30: #{tpu_custom_call.1} parent=1 // pred_check
      %p164 = pneg %p56
    $region31: #{tpu_custom_call.1} parent=1 // pred_check_branch
      %166 = sbr.rel (%p164) target = $region33
    $region32: #{tpu_custom_call.1} parent=1 // pred_region
      %v167 = vld [vmem:[#allocation2] sm:$0xff]
      %168 = vadd.xlane.f32.xlu0 %v167
      %v169 = vpop.xlane.xlu0 %168
      %v170 = vrot.slane %v169, 4
      %v171 = vadd.f32 %v169, %v170
      %v172 = vrot.slane %v171, 2
      %v173 = vadd.f32 %v171, %v172
      %v174 = vrot.slane %v173, 1
      %v175 = vadd.f32 %v173, %v174
      %s176 = vtos %v175
      %v177 = vstv %s176
      %vm178 = vcmask 0
      %179 = vst.msk [vmem:[#allocation8] sm:$0x1] %vm178, %v177
    $region33: #{tpu_custom_call.1} parent=1 // pred_fallthru
      _
    // Predicated region
    $region34: #{tpu_custom_call.1} parent=1 // pred_check
      _
    $region35: #{tpu_custom_call.1} parent=1 // pred_check_branch
      %181 = sbr.rel (0) target = $region37
    $region36: #{tpu_custom_call.1} parent=1 // pred_region
      %183 = vsyncadd [#allocation5], 0
      %s185 = sshll.u32 [#allocation8], 4
      %s186 = int_to_ptr.vmem [resolvable:$true] %s185
      %s187 = sshll.u32 %s2, 4
      %s188 = int_to_ptr.hbm [resolvable:$true] %s187
      %190 = dma.vmem_to_hbm [thread:$0]  %s186, 16, %s188, [#allocation5]
    $region37: #{tpu_custom_call.1} parent=1 // pred_fallthru
      _
    // Predicated region
    $region38: #{tpu_custom_call.1} parent=1 // pred_check
      _
    $region39: #{tpu_custom_call.1} parent=1 // pred_check_branch
      %192 = sbr.rel (0) target = $region41
    $region40: #{tpu_custom_call.1} parent=1 // pred_region
      %194 = dma.done [#allocation5], 16
    $region41: #{tpu_custom_call.1} parent=1 // pred_fallthru
      _
    %195 = vsyncpa [#allocation4], 1
    %196 = vsyncpa [#allocation7], 1
    %197 = vsyncpa [#allocation5], 1

</llo_original>
